<compile_context>
chip_gen: v7x
topology: tpu7x:2x2x1
jax: 0.10.0
libtpu: 0.0.40
codegen_flags: <defaults>
</compile_context>

<pallas_src>
import math

import jax
import jax.numpy as jnp
from jax.experimental import pallas as pl
from jax.experimental.pallas import tpu as pltpu


def _aff_kernel(x_ref, alpha_ref, beta_ref, o_ref):
    # x_ref: (TR, W) row tile; alpha_ref / beta_ref: (1, W) f32, broadcast
    # over sublanes by the VPU.  Compute in f32, cast on store.
    x = x_ref[...].astype(jnp.float32)
    o_ref[...] = (x * alpha_ref[...] + beta_ref[...]).astype(o_ref.dtype)


def aff(x, alpha, beta, *, max_block_bytes=4 * 1024 * 1024, donate_x=False):
    """x: (B, N, D); alpha, beta: (1, 1, D). Returns x * alpha + beta."""
    B, N, D = x.shape
    R0 = B * N
    itemsize = jnp.dtype(x.dtype).itemsize

    # --- Lane-pack channels so the last dim is a multiple of 128 ------------
    # k consecutive tokens per packed row; row width W = k * D.
    k = 128 // math.gcd(D, 128)
    x2 = x.reshape(R0, D)
    Rp = R0
    if k > 1 and R0 % k != 0:
        # Pad a handful of rows (< k) rather than drop to masked vst.msk.
        pad = k - R0 % k
        x2 = jnp.pad(x2, ((0, pad), (0, 0)))
        Rp = R0 + pad
    R, W = Rp // k, k * D
    x2 = x2.reshape(R, W)

    # Parameters stay f32 inside the kernel; tiled in the same channel order
    # as the packing: a2[0, j*D + d] == alpha[d].
    a2 = jnp.tile(alpha.reshape(1, D).astype(jnp.float32), (1, k))
    b2 = jnp.tile(beta.reshape(1, D).astype(jnp.float32), (1, k))

    # --- Row tiling: byte-budget driven, dtype-aware sublane alignment ------
    align = {1: 32, 2: 16}.get(itemsize, 8)
    rows_fit = max(align, max_block_bytes // (W * itemsize))
    tr = min(R, rows_fit)
    # v7x has 2 TensorCores: make sure the "parallel" grid axis has >= 2
    # steps whenever the tensor would otherwise fit in a single block.
    if tr >= R and R > align:
        tr = pl.cdiv(R, 2)
    if tr < R:
        tr = max(align, (tr // align) * align)
        # Clamp back under the byte budget after alignment (pathological
        # wide-W guard); never below one aligned sublane group.
        while tr > align and tr * W * itemsize > max_block_bytes:
            tr -= align
    grid = (pl.cdiv(R, tr),)

    out2 = pl.pallas_call(
        _aff_kernel,
        out_shape=jax.ShapeDtypeStruct((R, W), x.dtype),
        grid_spec=pltpu.PrefetchScalarGridSpec(
            num_scalar_prefetch=0,
            grid=grid,
            in_specs=[
                pl.BlockSpec((tr, W), lambda r: (r, 0)),
                # Constant index_map: Pallas keeps these blocks resident and
                # does not re-DMA them every grid step.
                pl.BlockSpec((1, W), lambda r: (0, 0)),
                pl.BlockSpec((1, W), lambda r: (0, 0)),
            ],
            out_specs=pl.BlockSpec((tr, W), lambda r: (r, 0)),
        ),
        compiler_params=pltpu.CompilerParams(
            dimension_semantics=("parallel",),
            vmem_limit_bytes=32 * 1024 * 1024,
        ),
        # Alias x2 -> out2 only when the caller donates x (removes one
        # full-tensor HBM allocation; without donation XLA would insert a
        # defensive copy, which is worse).
        input_output_aliases=({0: 0} if donate_x else {}),
    )(x2, a2, b2)

    out = out2.reshape(Rp, D)
    if Rp != R0:
        out = out[:R0]
    return out.reshape(B, N, D)


if __name__ == "__main__":
    key = jax.random.PRNGKey(0)
    kx, ka, kb, k2, k3 = jax.random.split(key, 5)

    # --- Primary check: B=2, N=8, D=32 (packed path: k=4, W=128) ------------
    B, N, D = 2, 8, 32
    x = jax.random.normal(kx, (B, N, D), dtype=jnp.float32)
    # Parameters per the module's __init__ (alpha=ones, beta=zeros), perturbed
    # deterministically so the affine transform is non-trivial.
    alpha = jnp.ones((1, 1, D), dtype=jnp.float32) \
        + 0.1 * jax.random.normal(ka, (1, 1, D), dtype=jnp.float32)
    beta = jnp.zeros((1, 1, D), dtype=jnp.float32) \
        + 0.1 * jax.random.normal(kb, (1, 1, D), dtype=jnp.float32)

    out = jax.block_until_ready(aff(x, alpha, beta))
    ref = x * alpha + beta
    assert jnp.allclose(out, ref, atol=1e-6, rtol=1e-6), "mismatch (D=32)"

    # --- Different pack factor: D=48 -> k=8, W=384 ---------------------------
    B2, N2, D2 = 1, 16, 48
    x2 = jax.random.normal(k2, (B2, N2, D2), dtype=jnp.float32)
    alpha2 = jnp.linspace(0.5, 1.5, D2, dtype=jnp.float32).reshape(1, 1, D2)
    beta2 = jnp.linspace(-0.2, 0.2, D2, dtype=jnp.float32).reshape(1, 1, D2)
    out2 = jax.block_until_ready(aff(x2, alpha2, beta2))
    ref2 = x2 * alpha2 + beta2
    assert jnp.allclose(out2, ref2, atol=1e-6, rtol=1e-6), "mismatch (D=48)"

    # --- Row-padding path: B*N not a multiple of k (R0=10, k=8) -------------
    B3, N3, D3 = 1, 10, 48
    x3 = jax.random.normal(k3, (B3, N3, D3), dtype=jnp.float32)
    out3 = jax.block_until_ready(aff(x3, alpha2, beta2))
    ref3 = x3 * alpha2 + beta2
    assert jnp.allclose(out3, ref3, atol=1e-6, rtol=1e-6), "mismatch (padded rows)"

    # --- bf16 activations: f32 parameter math inside the kernel -------------
    xb = x.astype(jnp.bfloat16)
    outb = jax.block_until_ready(aff(xb, alpha, beta))
    refb = (xb.astype(jnp.float32) * alpha + beta).astype(jnp.bfloat16)
    assert jnp.allclose(outb.astype(jnp.float32), refb.astype(jnp.float32),
                        atol=2e-2, rtol=2e-2), "mismatch (bf16)"

    print("KERNEL_OK")
</pallas_src>

<mosaic_0001>
module attributes {stable_mosaic.version = 11 : i64} {
  func.func @_aff_kernel(%arg0: i32, %arg1: memref<4x128xf32, #tpu.memory_space<vmem>>, %arg2: memref<1x128xf32, #tpu.memory_space<vmem>>, %arg3: memref<1x128xf32, #tpu.memory_space<vmem>>, %arg4: memref<4x128xf32, #tpu.memory_space<vmem>>) attributes {dimension_semantics = [#tpu.dimension_semantics<parallel>], iteration_bounds = array<i64: 1>, scalar_prefetch = 0 : i64, scratch_operands = 0 : i64, tpu.core_type = #tpu.core_type<tc>, window_params = [{transform_indices = @transform_0, window_bounds = array<i64: 4, 128>}, {pipeline_mode = #tpu.pipeline_mode<synchronous>, transform_indices = @transform_1, window_bounds = array<i64: 1, 128>}, {pipeline_mode = #tpu.pipeline_mode<synchronous>, transform_indices = @transform_2, window_bounds = array<i64: 1, 128>}, {transform_indices = @transform_3, window_bounds = array<i64: 4, 128>}]} {
    %c0 = arith.constant 0 : index
    %c0_0 = arith.constant 0 : index
    %0 = vector.load %arg1[%c0, %c0_0] : memref<4x128xf32, #tpu.memory_space<vmem>>, vector<4x128xf32>
    %c0_1 = arith.constant 0 : index
    %c0_2 = arith.constant 0 : index
    %1 = vector.load %arg2[%c0_1, %c0_2] : memref<1x128xf32, #tpu.memory_space<vmem>>, vector<1x128xf32>
    %2 = vector.broadcast %1 : vector<1x128xf32> to vector<4x128xf32>
    %3 = arith.mulf %0, %2 : vector<4x128xf32>
    %c0_3 = arith.constant 0 : index
    %c0_4 = arith.constant 0 : index
    %4 = vector.load %arg3[%c0_3, %c0_4] : memref<1x128xf32, #tpu.memory_space<vmem>>, vector<1x128xf32>
    %5 = vector.broadcast %4 : vector<1x128xf32> to vector<4x128xf32>
    %6 = arith.addf %3, %5 : vector<4x128xf32>
    %c0_5 = arith.constant 0 : index
    %c0_6 = arith.constant 0 : index
    %7 = vector.load %arg4[%c0_5, %c0_6] : memref<4x128xf32, #tpu.memory_space<vmem>>, vector<4x128xf32>
    tpu.vector_store %arg4[%c0_5, %c0_6], %6 {strides = array<i32>} : memref<4x128xf32, #tpu.memory_space<vmem>>, vector<4x128xf32>,
    return
  }
  func.func @transform_0(%arg0: i32) -> (i32, i32) {
    %c0_i32 = arith.constant 0 : i32
    %c0_i32_0 = arith.constant 0 : i32
    return %arg0, %c0_i32 : i32, i32
  }
  func.func @transform_1(%arg0: i32) -> (i32, i32) {
    %c0_i32 = arith.constant 0 : i32
    %c0_i32_0 = arith.constant 0 : i32
    %c0_i32_1 = arith.constant 0 : i32
    return %c0_i32, %c0_i32_0 : i32, i32
  }
  func.func @transform_2(%arg0: i32) -> (i32, i32) {
    %c0_i32 = arith.constant 0 : i32
    %c0_i32_0 = arith.constant 0 : i32
    %c0_i32_1 = arith.constant 0 : i32
    return %c0_i32, %c0_i32_0 : i32, i32
  }
  func.func @transform_3(%arg0: i32) -> (i32, i32) {
    %c0_i32 = arith.constant 0 : i32
    %c0_i32_0 = arith.constant 0 : i32
    return %arg0, %c0_i32 : i32, i32
  }
}

</mosaic_0001>

<llo_original>
// kernel: tpu_custom_call.1
$region0: #{tpu_custom_call.1}
  #allocation0 [shape = 'u32[]', space=smem, size = 0x4, offset = 0x4, fixed_abs, tag = 'smem constant byte address 0x4 - core index']
  #allocation1 [shape = 'u32[144,128]{1,0:T(1,128)}', space=vmem, size = 0x12000, scoped, tag = 'internal scratch']
  %s0 = inlined_call_operand.hbm [shape: f32[4,128], index: 0, kind: input, shape index: {}]
  %s1 = inlined_call_operand.vmem [shape: f32[1,128], index: 1, kind: input, shape index: {}]
  %s2 = inlined_call_operand.vmem [shape: f32[1,128], index: 2, kind: input, shape index: {}]
  %s3 = inlined_call_operand.hbm [shape: f32[4,128], index: 3, kind: output, shape index: {}]
  %s4 = sld [smem:[#allocation0]]
  $region26: #{tpu_custom_call.1} parent=0
    _
  %s6 = ssub.s32 1, %s4
  %s7 = scalar_select 0, %s6, %s4
  $region1: #{tpu_custom_call.1} parent=0
    #allocation2 [shape = 'u8[2048]{0}', space=vmem, size = 0x800, scoped, tag = 'input window, operand 0, single buffered']
    #allocation3 [shape = 's32[1]{0}', space=sflag, size = 0x4, scoped, tag = 'scoped memory for tpu_custom_call.1']
    #allocation4 [shape = 's32[1]{0}', space=sflag, size = 0x4, scoped, tag = 'scoped memory for tpu_custom_call.1']
    #allocation5 [shape = 'u8[2048]{0}', space=vmem, size = 0x800, scoped, tag = 'output window, operand 0, single buffered']
    %8 = vsyncpa [#allocation3], 0
    %9 = vsyncpa [#allocation4], 0
    // Predicated region
    $region2: #{tpu_custom_call.1} parent=1 // pred_check
      _
    $region3: #{tpu_custom_call.1} parent=1 // pred_check_branch
      %11 = sbr.rel (0) target = $region5
    $region4: #{tpu_custom_call.1} parent=1 // pred_region
      %s13 = ssub.s32 64, 64
      %14 = vsyncadd [#allocation3], %s13
      %s16 = sshll.u32 [#allocation2], 4
      %s17 = int_to_ptr.vmem [resolvable:$true] %s16
      %19 = dma.hbm_to_vmem [thread:$0]  %s0, 64, %s17, [#allocation3]
    $region5: #{tpu_custom_call.1} parent=1 // pred_fallthru
      _
    // Predicated region
    $region6: #{tpu_custom_call.1} parent=1 // pred_check
      _
    $region7: #{tpu_custom_call.1} parent=1 // pred_check_branch
      %21 = sbr.rel (0) target = $region9
    $region8: #{tpu_custom_call.1} parent=1 // pred_region
      _
    $region9: #{tpu_custom_call.1} parent=1 // pred_fallthru
      _
    // Predicated region
    $region10: #{tpu_custom_call.1} parent=1 // pred_check
      _
    $region11: #{tpu_custom_call.1} parent=1 // pred_check_branch
      %23 = sbr.rel (0) target = $region13
    $region12: #{tpu_custom_call.1} parent=1 // pred_region
      _
    $region13: #{tpu_custom_call.1} parent=1 // pred_fallthru
      _
    // Predicated region
    $region14: #{tpu_custom_call.1} parent=1 // pred_check
      _
    $region15: #{tpu_custom_call.1} parent=1 // pred_check_branch
      %25 = sbr.rel (0) target = $region17
    $region16: #{tpu_custom_call.1} parent=1 // pred_region
      %26 = dma.done [#allocation3], 64
    $region17: #{tpu_custom_call.1} parent=1 // pred_fallthru
      _
    %v27 = vld [vmem:[#allocation2] sm:$0xf]
    %v28 = vld [vmem:[%s1] sm:$0x1]
    %v30 = vlaneseq
    %v31 = vshrl.u32 %v30, 7
    %v32 = vsub.s32 0, %v31
    %v33 = vrot.slane %v28, %v32
    %v35 = vmul.f32 %v27, %v33
    %v36 = vld [vmem:[%s2] sm:$0x1]
    %v38 = vlaneseq
    %v39 = vshrl.u32 %v38, 7
    %v40 = vsub.s32 0, %v39
    %v41 = vrot.slane %v36, %v40
    %v43 = vadd.f32 %v35, %v41
    %44 = vst [vmem:[#allocation5] sm:$0xf] %v43
    // Predicated region
    $region18: #{tpu_custom_call.1} parent=1 // pred_check
      _
    $region19: #{tpu_custom_call.1} parent=1 // pred_check_branch
      %46 = sbr.rel (0) target = $region21
    $region20: #{tpu_custom_call.1} parent=1 // pred_region
      %s48 = ssub.s32 64, 64
      %49 = vsyncadd [#allocation4], %s48
      %s51 = sshll.u32 [#allocation5], 4
      %s52 = int_to_ptr.vmem [resolvable:$true] %s51
      %54 = dma.vmem_to_hbm [thread:$0]  %s52, 64, %s3, [#allocation4]
    $region21: #{tpu_custom_call.1} parent=1 // pred_fallthru
      _
    // Predicated region
    $region22: #{tpu_custom_call.1} parent=1 // pred_check
      _
    $region23: #{tpu_custom_call.1} parent=1 // pred_check_branch
      %56 = sbr.rel (0) target = $region25
    $region24: #{tpu_custom_call.1} parent=1 // pred_region
      %57 = dma.done [#allocation4], 64
    $region25: #{tpu_custom_call.1} parent=1 // pred_fallthru
      _
    %58 = vsyncpa [#allocation3], 1
    %59 = vsyncpa [#allocation4], 1

</llo_original>
